<compile_context>
chip_gen: v6e
topology: v6e:2x2x1
jax: 0.10.0
libtpu: 0.0.40
codegen_flags: <defaults>
</compile_context>

<pallas_src>
import jax
import jax.numpy as jnp
from jax import lax
from jax.experimental import pallas as pl
from jax.experimental.pallas import tpu as pltpu


def _make_listnet_kernel(batch_size: int, tile_rows: int):
    def kernel(pred_ref, labels_ref, out_ref, acc_ref):
        i = pl.program_id(0)
        nsteps = pl.num_programs(0)

        preds = pred_ref[...].astype(jnp.float32)      # (TB, N)
        labels = labels_ref[...]                       # (TB, N), any int dtype

        is_rel = labels > -1                           # target value 1
        is_pad = labels == -1                          # target value -inf

        # Target values live in {0, 1, -inf}; the row max needs no full-width pass.
        any_rel = jnp.any(is_rel, axis=1, keepdims=True)                          # (TB, 1)
        any_zero = jnp.any(jnp.logical_not(is_rel | is_pad), axis=1, keepdims=True)
        vmax = jnp.where(any_rel, 1.0,
                         jnp.where(any_zero, 0.0, -jnp.inf)).astype(jnp.float32)  # (TB, 1)

        # exp(vals - vmax) built from per-row scalars + a select (no full-width exp).
        exp_rel = jnp.exp(1.0 - vmax)                                             # (TB, 1)
        exp_zero = jnp.exp(0.0 - vmax)                                            # (TB, 1)
        ev = jnp.where(is_rel, exp_rel, jnp.where(is_pad, 0.0, exp_zero))         # (TB, N)
        sum_ev = jnp.sum(ev, axis=1, keepdims=True)                               # (TB, 1)
        log_sum_ev = jnp.log(sum_ev)                                              # (TB, 1)
        probs = ev * pl.reciprocal(sum_ev, approx=False)                          # (TB, N)
        # log(target) directly in log space (only consumed where target > 0).
        log_target = jnp.where(is_rel,
                               (1.0 - vmax) - log_sum_ev,
                               (0.0 - vmax) - log_sum_ev)                         # (TB, N)

        # log_softmax(predictions): the single full-width transcendental pass.
        pmax = jnp.max(preds, axis=1, keepdims=True)
        shifted = preds - pmax
        logz = jnp.log(jnp.sum(jnp.exp(shifted), axis=1, keepdims=True))          # (TB, 1)
        logp_pred = shifted - logz                                                # (TB, N)

        # KLDiv pointwise: target * (log(target) - logp), 0 where target == 0.
        valid = jnp.logical_and(jnp.logical_not(is_pad), sum_ev > 0.0)
        if batch_size % tile_rows != 0:
            # Mask rows of the overhanging last tile (reads there are undefined).
            rows = i * tile_rows + lax.broadcasted_iota(jnp.int32, (tile_rows, 1), 0)
            valid = jnp.logical_and(valid, rows < batch_size)
        pointwise = jnp.where(valid, probs * (log_target - logp_pred), 0.0)
        partial = jnp.sum(pointwise)

        @pl.when(i == 0)
        def _init():
            acc_ref[0] = jnp.float32(0.0)

        acc_ref[0] = acc_ref[0] + partial

        @pl.when(i == nsteps - 1)
        def _finalize():
            out_ref[0, 0] = acc_ref[0] / jnp.float32(batch_size)

    return kernel


def _auto_tile_rows(num_docs: int, bytes_per_elem: int) -> int:
    # ~1 MiB of raw inputs per tile: 2 inputs x 2 pipeline buffers stays around
    # 4 MiB -- comfortably inside v5e's 16 MiB default scoped VMEM and v7x's
    # 64 MiB physical VMEM, while big enough to amortize per-step overhead.
    budget_bytes = 1 << 20
    tb = budget_bytes // max(1, num_docs * bytes_per_elem)
    return int(max(32, min(1024, (tb // 32) * 32)))


def relevance_listnet_loss(predictions, labels, *, tile_rows=None):
    """ListNet loss.

    predictions: (B, N) float array (f32 or bf16 accepted as-is).
    labels:      (B, N) int array (int32/int16/int8 accepted as-is).
    Returns scalar float32 loss (mean per query).
    """
    B, N = predictions.shape
    assert labels.shape == (B, N)

    bytes_per_elem = predictions.dtype.itemsize + labels.dtype.itemsize
    tb = tile_rows if tile_rows is not None else _auto_tile_rows(N, bytes_per_elem)
    if tb >= B or B <= 32:
        tb = B                                   # single tile spanning the whole batch
    else:
        tb = max(32, (min(tb, B) // 32) * 32)    # sublane-packing safe down to int8/bf16
    grid = pl.cdiv(B, tb)

    kernel = _make_listnet_kernel(B, tb)
    out = pl.pallas_call(
        kernel,
        out_shape=jax.ShapeDtypeStruct((1, 1), jnp.float32),
        grid_spec=pltpu.PrefetchScalarGridSpec(
            num_scalar_prefetch=0,
            grid=(grid,),
            in_specs=[
                pl.BlockSpec((tb, N), lambda i: (i, 0)),   # predictions tile
                pl.BlockSpec((tb, N), lambda i: (i, 0)),   # labels tile
            ],
            out_specs=pl.BlockSpec(memory_space=pltpu.MemorySpace.SMEM),
            scratch_shapes=[pltpu.SMEM((1,), jnp.float32)],
        ),
        compiler_params=pltpu.CompilerParams(
            dimension_semantics=("arbitrary",),            # running reduction over tiles
            vmem_limit_bytes=32 * 1024 * 1024,
        ),
    )(predictions, labels)
    return out[0, 0]


def _reference_loss(predictions, labels):
    # Pure-JAX reference mirroring the PyTorch module exactly.
    preds = predictions.astype(jnp.float32)
    vals = jnp.zeros_like(preds)
    vals = jnp.where(labels > -1, 1.0, vals)
    vals = jnp.where(labels == -1, -jnp.inf, vals)
    probs = jax.nn.softmax(vals, axis=1)
    logp = jax.nn.log_softmax(preds, axis=1)
    pointwise = jnp.where(probs > 0.0, probs * (jnp.log(probs) - logp), 0.0)
    return jnp.sum(pointwise) / preds.shape[0]


if __name__ == "__main__":
    key = jax.random.PRNGKey(0)
    k1, k2 = jax.random.split(key)

    # --- Test 1: module-spec-sized shapes (batch=4, num_docs=16), f32 / int32 ---
    B, N = 4, 16
    predictions = jax.random.normal(k1, (B, N), dtype=jnp.float32) * 3.0
    n_rel = [1, 2, 3, 4]
    rows = []
    for b in range(B):
        n = n_rel[b]
        rel_idx = [(b * 5 + 2 * j) % N for j in range(n)]
        rows.append(rel_idx + [-1] * (N - n))
    labels = jnp.asarray(rows, dtype=jnp.int32)

    loss = relevance_listnet_loss(predictions, labels)
    jax.block_until_ready(loss)
    ref = _reference_loss(predictions, labels)
    assert jnp.allclose(loss, ref, rtol=1e-5, atol=1e-5), (loss, ref)

    # --- Test 2: multi-tile pipelined path (grid > 1) with non-divisible batch ---
    B2, N2 = 100, 16
    preds2 = jax.random.normal(k2, (B2, N2), dtype=jnp.float32) * 2.0
    rows2 = []
    for b in range(B2):
        n = 1 + (b % 4)
        rel_idx = [(b * 7 + 3 * j) % N2 for j in range(n)]
        rows2.append(rel_idx + [-1] * (N2 - n))
    labels2 = jnp.asarray(rows2, dtype=jnp.int32)

    loss2 = relevance_listnet_loss(preds2, labels2, tile_rows=32)
    jax.block_until_ready(loss2)
    ref2 = _reference_loss(preds2, labels2)
    assert jnp.allclose(loss2, ref2, rtol=1e-5, atol=1e-5), (loss2, ref2)

    # --- Test 3: narrow prediction dtype fed straight through (no wrapper casts) ---
    preds_bf16 = predictions.astype(jnp.bfloat16)
    loss3 = relevance_listnet_loss(preds_bf16, labels)
    jax.block_until_ready(loss3)
    ref3 = _reference_loss(preds_bf16, labels)
    assert jnp.allclose(loss3, ref3, rtol=1e-5, atol=1e-5), (loss3, ref3)

    print("KERNEL_OK")
</pallas_src>

<mosaic_0001>
module attributes {stable_mosaic.version = 11 : i64} {
  func.func @kernel(%arg0: i32, %arg1: memref<4x16xf32, #tpu.memory_space<vmem>>, %arg2: memref<4x16xi32, #tpu.memory_space<vmem>>, %arg3: memref<1x1xf32, #tpu.memory_space<smem>>, %arg4: memref<1xf32, #tpu.memory_space<smem>>) attributes {dimension_semantics = [#tpu.dimension_semantics<arbitrary>], iteration_bounds = array<i64: 1>, scalar_prefetch = 0 : i64, scratch_operands = 1 : i64, tpu.core_type = #tpu.core_type<tc>, window_params = [{transform_indices = @transform_0, window_bounds = array<i64: 4, 16>}, {transform_indices = @transform_1, window_bounds = array<i64: 4, 16>}, {transform_indices = @transform_2, window_bounds = array<i64: 1, 1>}]} {
    %c0 = arith.constant 0 : index
    %c0_0 = arith.constant 0 : index
    %0 = vector.load %arg1[%c0, %c0_0] : memref<4x16xf32, #tpu.memory_space<vmem>>, vector<4x16xf32>
    %c0_1 = arith.constant 0 : index
    %c0_2 = arith.constant 0 : index
    %1 = vector.load %arg2[%c0_1, %c0_2] : memref<4x16xi32, #tpu.memory_space<vmem>>, vector<4x16xi32>
    %c-1_i32 = arith.constant -1 : i32
    %2 = vector.broadcast %c-1_i32 : i32 to vector<4x16xi32>
    %3 = arith.cmpi sgt, %1, %2 : vector<4x16xi32>
    %c-1_i32_3 = arith.constant -1 : i32
    %4 = vector.broadcast %c-1_i32_3 : i32 to vector<4x16xi32>
    %5 = arith.cmpi eq, %1, %4 : vector<4x16xi32>
    %cst = arith.constant 1.000000e+00 : f32
    %cst_4 = arith.constant 0.000000e+00 : f32
    %6 = vector.broadcast %cst : f32 to vector<4x16xf32>
    %7 = vector.broadcast %cst_4 : f32 to vector<4x16xf32>
    %8 = arith.select %3, %6, %7 : vector<4x16xi1>, vector<4x16xf32>
    %cst_5 = arith.constant dense<0xFF800000> : vector<4xf32>
    %9 = vector.multi_reduction <maximumf>, %8, %cst_5 [1] : vector<4x16xf32> to vector<4xf32>
    %cst_6 = arith.constant 0.000000e+00 : f32
    %10 = vector.broadcast %cst_6 : f32 to vector<4xf32>
    %11 = arith.cmpf ogt, %9, %10 : vector<4xf32>
    %12 = vector.shape_cast %11 : vector<4xi1> to vector<4x1xi1>
    %13 = arith.ori %3, %5 : vector<4x16xi1>
    %cst_7 = arith.constant dense<true> : vector<4x16xi1>
    %14 = arith.xori %13, %cst_7 : vector<4x16xi1>
    %cst_8 = arith.constant 1.000000e+00 : f32
    %cst_9 = arith.constant 0.000000e+00 : f32
    %15 = vector.broadcast %cst_8 : f32 to vector<4x16xf32>
    %16 = vector.broadcast %cst_9 : f32 to vector<4x16xf32>
    %17 = arith.select %14, %15, %16 : vector<4x16xi1>, vector<4x16xf32>
    %cst_10 = arith.constant dense<0xFF800000> : vector<4xf32>
    %18 = vector.multi_reduction <maximumf>, %17, %cst_10 [1] : vector<4x16xf32> to vector<4xf32>
    %cst_11 = arith.constant 0.000000e+00 : f32
    %19 = vector.broadcast %cst_11 : f32 to vector<4xf32>
    %20 = arith.cmpf ogt, %18, %19 : vector<4xf32>
    %21 = vector.shape_cast %20 : vector<4xi1> to vector<4x1xi1>
    %cst_12 = arith.constant 0.000000e+00 : f32
    %cst_13 = arith.constant 0xFF800000 : f32
    %22 = vector.broadcast %cst_12 : f32 to vector<4x1xf32>
    %23 = vector.broadcast %cst_13 : f32 to vector<4x1xf32>
    %24 = arith.select %21, %22, %23 : vector<4x1xi1>, vector<4x1xf32>
    %cst_14 = arith.constant 1.000000e+00 : f32
    %25 = vector.broadcast %cst_14 : f32 to vector<4x1xf32>
    %26 = arith.select %12, %25, %24 : vector<4x1xi1>, vector<4x1xf32>
    %cst_15 = arith.constant 1.000000e+00 : f32
    %27 = vector.broadcast %cst_15 : f32 to vector<4x1xf32>
    %28 = arith.subf %27, %26 : vector<4x1xf32>
    %29 = math.exp %28 : vector<4x1xf32>
    %cst_16 = arith.constant 0.000000e+00 : f32
    %30 = vector.broadcast %cst_16 : f32 to vector<4x1xf32>
    %31 = arith.subf %30, %26 : vector<4x1xf32>
    %32 = math.exp %31 : vector<4x1xf32>
    %cst_17 = arith.constant 0.000000e+00 : f32
    %33 = vector.broadcast %cst_17 : f32 to vector<4x16xf32>
    %34 = vector.shape_cast %32 : vector<4x1xf32> to vector<4x1xf32>
    %35 = vector.broadcast %34 : vector<4x1xf32> to vector<4x16xf32>
    %36 = arith.select %5, %33, %35 : vector<4x16xi1>, vector<4x16xf32>
    %37 = vector.shape_cast %29 : vector<4x1xf32> to vector<4x1xf32>
    %38 = vector.broadcast %37 : vector<4x1xf32> to vector<4x16xf32>
    %39 = arith.select %3, %38, %36 : vector<4x16xi1>, vector<4x16xf32>
    %cst_18 = arith.constant dense<0.000000e+00> : vector<4xf32>
    %40 = vector.multi_reduction <add>, %39, %cst_18 [1] : vector<4x16xf32> to vector<4xf32>
    %41 = vector.shape_cast %40 : vector<4xf32> to vector<4x1xf32>
    %42 = math.log %41 : vector<4x1xf32>
    %43 = tpu.reciprocal %41 : vector<4x1xf32> -> vector<4x1xf32>
    %44 = vector.broadcast %43 : vector<4x1xf32> to vector<4x16xf32>
    %45 = arith.mulf %39, %44 : vector<4x16xf32>
    %cst_19 = arith.constant 1.000000e+00 : f32
    %46 = vector.broadcast %cst_19 : f32 to vector<4x1xf32>
    %47 = arith.subf %46, %26 : vector<4x1xf32>
    %48 = arith.subf %47, %42 : vector<4x1xf32>
    %cst_20 = arith.constant 0.000000e+00 : f32
    %49 = vector.broadcast %cst_20 : f32 to vector<4x1xf32>
    %50 = arith.subf %49, %26 : vector<4x1xf32>
    %51 = arith.subf %50, %42 : vector<4x1xf32>
    %52 = vector.shape_cast %48 : vector<4x1xf32> to vector<4x1xf32>
    %53 = vector.broadcast %52 : vector<4x1xf32> to vector<4x16xf32>
    %54 = vector.shape_cast %51 : vector<4x1xf32> to vector<4x1xf32>
    %55 = vector.broadcast %54 : vector<4x1xf32> to vector<4x16xf32>
    %56 = arith.select %3, %53, %55 : vector<4x16xi1>, vector<4x16xf32>
    %cst_21 = arith.constant dense<0xFF800000> : vector<4xf32>
    %57 = vector.multi_reduction <maximumf>, %0, %cst_21 [1] : vector<4x16xf32> to vector<4xf32>
    %58 = vector.shape_cast %57 : vector<4xf32> to vector<4x1xf32>
    %59 = vector.broadcast %58 : vector<4x1xf32> to vector<4x16xf32>
    %60 = arith.subf %0, %59 : vector<4x16xf32>
    %61 = math.exp %60 : vector<4x16xf32>
    %cst_22 = arith.constant dense<0.000000e+00> : vector<4xf32>
    %62 = vector.multi_reduction <add>, %61, %cst_22 [1] : vector<4x16xf32> to vector<4xf32>
    %63 = vector.shape_cast %62 : vector<4xf32> to vector<4x1xf32>
    %64 = math.log %63 : vector<4x1xf32>
    %65 = vector.broadcast %64 : vector<4x1xf32> to vector<4x16xf32>
    %66 = arith.subf %60, %65 : vector<4x16xf32>
    %cst_23 = arith.constant dense<true> : vector<4x16xi1>
    %67 = arith.xori %5, %cst_23 : vector<4x16xi1>
    %cst_24 = arith.constant 0.000000e+00 : f32
    %68 = vector.broadcast %cst_24 : f32 to vector<4x1xf32>
    %69 = arith.cmpf ogt, %41, %68 : vector<4x1xf32>
    %70 = vector.broadcast %69 : vector<4x1xi1> to vector<4x16xi1>
    %71 = arith.andi %67, %70 : vector<4x16xi1>
    %72 = arith.subf %56, %66 : vector<4x16xf32>
    %73 = arith.mulf %45, %72 : vector<4x16xf32>
    %cst_25 = arith.constant 0.000000e+00 : f32
    %74 = vector.broadcast %cst_25 : f32 to vector<4x16xf32>
    %75 = arith.select %71, %73, %74 : vector<4x16xi1>, vector<4x16xf32>
    %76 = vector.shape_cast %75 : vector<4x16xf32> to vector<1x4x16xf32>
    %cst_26 = arith.constant dense<0.000000e+00> : vector<1xf32>
    %77 = vector.multi_reduction <add>, %76, %cst_26 [1, 2] : vector<1x4x16xf32> to vector<1xf32>
    %78 = vector.shape_cast %77 : vector<1xf32> to vector<1x1x1xf32>
    %79 = vector.extract %78[0, 0, 0] : f32 from vector<1x1x1xf32>
    %c0_i32 = arith.constant 0 : i32
    %80 = arith.cmpi eq, %arg0, %c0_i32 : i32
    %81 = arith.extui %80 : i1 to i32
    %c0_i32_27 = arith.constant 0 : i32
    %82 = arith.cmpi ne, %81, %c0_i32_27 : i32
    scf.if %82 {
      %cst_32 = arith.constant 0.000000e+00 : f32
      %c0_33 = arith.constant 0 : index
      %89 = memref.load %arg4[%c0_33] : memref<1xf32, #tpu.memory_space<smem>>
      memref.store %cst_32, %arg4[%c0_33] : memref<1xf32, #tpu.memory_space<smem>>
    } else {
    }
    %c0_28 = arith.constant 0 : index
    %83 = memref.load %arg4[%c0_28] : memref<1xf32, #tpu.memory_space<smem>>
    %84 = arith.addf %83, %79 : f32
    %c0_29 = arith.constant 0 : index
    %85 = memref.load %arg4[%c0_29] : memref<1xf32, #tpu.memory_space<smem>>
    memref.store %84, %arg4[%c0_29] : memref<1xf32, #tpu.memory_space<smem>>
    %c0_i32_30 = arith.constant 0 : i32
    %86 = arith.cmpi eq, %arg0, %c0_i32_30 : i32
    %87 = arith.extui %86 : i1 to i32
    %c0_i32_31 = arith.constant 0 : i32
    %88 = arith.cmpi ne, %87, %c0_i32_31 : i32
    scf.if %88 {
      %c0_32 = arith.constant 0 : index
      %89 = memref.load %arg4[%c0_32] : memref<1xf32, #tpu.memory_space<smem>>
      %cst_33 = arith.constant 4.000000e+00 : f32
      %90 = arith.divf %89, %cst_33 : f32
      %c0_34 = arith.constant 0 : index
      %c0_35 = arith.constant 0 : index
      %91 = memref.load %arg3[%c0_34, %c0_35] : memref<1x1xf32, #tpu.memory_space<smem>>
      memref.store %90, %arg3[%c0_34, %c0_35] : memref<1x1xf32, #tpu.memory_space<smem>>
    } else {
    }
    return
  }
  func.func @transform_0(%arg0: i32) -> (i32, i32) {
    %c0_i32 = arith.constant 0 : i32
    %c0_i32_0 = arith.constant 0 : i32
    return %arg0, %c0_i32 : i32, i32
  }
  func.func @transform_1(%arg0: i32) -> (i32, i32) {
    %c0_i32 = arith.constant 0 : i32
    %c0_i32_0 = arith.constant 0 : i32
    return %arg0, %c0_i32 : i32, i32
  }
  func.func @transform_2(%arg0: i32) -> (i32, i32) {
    %c0_i32 = arith.constant 0 : i32
    %c0_i32_0 = arith.constant 0 : i32
    %c0_i32_1 = arith.constant 0 : i32
    return %c0_i32, %c0_i32_0 : i32, i32
  }
}

</mosaic_0001>

<llo_original>
// kernel: tpu_custom_call.1
$region0: #{tpu_custom_call.1}
  #allocation0 [shape = 'u32[]', space=smem, size = 0x4, offset = 0x4, fixed_abs, tag = 'smem constant byte address 0x4 - core index']
  #allocation1 [shape = 'u32[144,128]{1,0:T(1,128)}', space=vmem, size = 0x12000, scoped, tag = 'internal scratch']
  #allocation2 [shape = 'f32[1]{0:T(128)}', space=smem, size = 0x200, scoped, tag = 'scratch operand']
  %s0 = inlined_call_operand.hbm [shape: f32[4,16], index: 0, kind: input, shape index: {}]
  %s1 = inlined_call_operand.hbm [shape: s32[4,16], index: 1, kind: input, shape index: {}]
  %s2 = inlined_call_operand.hbm [shape: f32[1,1], index: 2, kind: output, shape index: {}]
  %s3 = sld [smem:[#allocation0]]
  $region34: #{tpu_custom_call.1} parent=0
    _
  %s5 = ssub.s32 1, %s3
  %s6 = scalar_select 0, %s5, %s3
  $region1: #{tpu_custom_call.1} parent=0
    #allocation3 [shape = 'u8[2048]{0}', space=vmem, size = 0x800, scoped, tag = 'input window, operand 0, single buffered']
    #allocation4 [shape = 's32[1]{0}', space=sflag, size = 0x4, scoped, tag = 'scoped memory for tpu_custom_call.1']
    #allocation5 [shape = 's32[1]{0}', space=sflag, size = 0x4, scoped, tag = 'scoped memory for tpu_custom_call.1']
    #allocation6 [shape = 'u8[2048]{0}', space=vmem, size = 0x800, scoped, tag = 'input window, operand 1, single buffered']
    #allocation7 [shape = 's32[1]{0}', space=sflag, size = 0x4, scoped, tag = 'scoped memory for tpu_custom_call.1']
    #allocation8 [shape = 'u8[512]{0}', space=smem, size = 0x200, scoped, tag = 'output window, operand 0, single buffered']
    %7 = vsyncpa [#allocation4], 0
    %8 = vsyncpa [#allocation7], 0
    %9 = vsyncpa [#allocation5], 0
    // Predicated region
    $region2: #{tpu_custom_call.1} parent=1 // pred_check
      _
    $region3: #{tpu_custom_call.1} parent=1 // pred_check_branch
      %11 = sbr.rel (0) target = $region5
    $region4: #{tpu_custom_call.1} parent=1 // pred_region
      %s13 = ssub.s32 64, 64
      %14 = vsyncadd [#allocation4], %s13
      %s16 = sshll.u32 [#allocation3], 4
      %s17 = int_to_ptr.vmem [resolvable:$true] %s16
      %19 = dma.hbm_to_vmem [thread:$0]  %s0, 64, %s17, [#allocation4]
    $region5: #{tpu_custom_call.1} parent=1 // pred_fallthru
      _
    // Predicated region
    $region6: #{tpu_custom_call.1} parent=1 // pred_check
      _
    $region7: #{tpu_custom_call.1} parent=1 // pred_check_branch
      %21 = sbr.rel (0) target = $region9
    $region8: #{tpu_custom_call.1} parent=1 // pred_region
      %s23 = ssub.s32 64, 64
      %24 = vsyncadd [#allocation7], %s23
      %s26 = sshll.u32 [#allocation6], 4
      %s27 = int_to_ptr.vmem [resolvable:$true] %s26
      %29 = dma.hbm_to_vmem [thread:$0]  %s1, 64, %s27, [#allocation7]
    $region9: #{tpu_custom_call.1} parent=1 // pred_fallthru
      _
    // Predicated region
    $region10: #{tpu_custom_call.1} parent=1 // pred_check
      _
    $region11: #{tpu_custom_call.1} parent=1 // pred_check_branch
      %31 = sbr.rel (0) target = $region13
    $region12: #{tpu_custom_call.1} parent=1 // pred_region
      %32 = dma.done [#allocation4], 64
    $region13: #{tpu_custom_call.1} parent=1 // pred_fallthru
      _
    // Predicated region
    $region14: #{tpu_custom_call.1} parent=1 // pred_check
      _
    $region15: #{tpu_custom_call.1} parent=1 // pred_check_branch
      %34 = sbr.rel (0) target = $region17
    $region16: #{tpu_custom_call.1} parent=1 // pred_region
      %35 = dma.done [#allocation7], 64
    $region17: #{tpu_custom_call.1} parent=1 // pred_fallthru
      _
    %v36 = vld [vmem:[#allocation3] sm:$0xf]
    %v37 = vld [vmem:[#allocation6] sm:$0xf]
    %vm38 = vcmp.gt.s32.totalorder %v37, 4294967295
    %vm39 = vcmp.eq.s32.totalorder %v37, 4294967295
    %v40 = vsel %vm38, 1.0, 0.0
    %vm41 = vcmask 125952
    %v42 = vsel %vm41, %v40, -inf
    %43 = vmax.xlane.f32.xlu0 %v42
    %v44 = vpop.xlane.xlu0 %43
    %vm45 = vcmp.gt.f32.partialorder %v44, 0.0
    %vm46 = vmor %vm38, %vm39
    %vm47 = vmxor %vm46, 1
    %v48 = vsel %vm47, 1.0, 0.0
    %v49 = vsel %vm41, %v48, -inf
    %50 = vmax.xlane.f32.xlu0 %v49
    %v51 = vpop.xlane.xlu0 %50
    %vm52 = vcmp.gt.f32.partialorder %v51, 0.0
    %v53 = vsel %vm52, 0.0, -inf
    %v54 = vsel %vm45, 1.0, %v53
    %v55 = vsub.f32 1.0, %v54
    %v56 = vmul.f32 %v55, 1.442695
    %v57 = vpow.pop %v56
    %v58 = vsub.f32 0.0, %v54
    %v59 = vmul.f32 %v58, 1.442695
    %v60 = vpow.pop %v59
    %v61 = vsel %vm39, 0.0, %v60
    %v62 = vsel %vm38, %v57, %v61
    %v63 = vsel %vm41, %v62, 0.0
    %64 = vadd.xlane.f32.xlu0 %v63
    %v65 = vpop.xlane.xlu0 %64
    %v66 = vlog2.pop %v65
    %v67 = vmul.f32 %v66, 0.6931472
    %v68 = vrcp.pop %v65
    %v69 = vmul.f32 %v62, %v68
    %v70 = vsub.f32 %v55, %v67
    %v71 = vsub.f32 %v58, %v67
    %v72 = vsel %vm38, %v70, %v71
    %v73 = vsel %vm41, %v36, -inf
    %74 = vmax.xlane.f32.xlu0 %v73
    %v75 = vpop.xlane.xlu0 %74
    %v76 = vsub.f32 %v36, %v75
    %v77 = vmul.f32 %v76, 1.442695
    %v78 = vpow.pop %v77
    %v79 = vsel %vm41, %v78, 0.0
    %80 = vadd.xlane.f32.xlu0 %v79
    %v81 = vpop.xlane.xlu0 %80
    %v82 = vlog2.pop %v81
    %v83 = vmul.f32 %v82, 0.6931472
    %v84 = vsub.f32 %v76, %v83
    %vm85 = vmxor %vm39, 1
    %vm86 = vcmp.gt.f32.partialorder %v65, 0.0
    %v87 = vsel %vm86, 1, 0
    %vm88 = vcmp.eq.s32.totalorder %v87, 1
    %vm89 = vmand %vm85, %vm88
    %v90 = vsub.f32 %v72, %v84
    %v91 = vmul.f32 %v69, %v90
    %v92 = vsel %vm89, %v91, 0.0
    %v93 = vsel %vm41, %v92, 0.0
    %94 = vadd.xlane.f32.xlu0 %v93
    %v95 = vpop.xlane.xlu0 %94
    %v96 = vrot.slane %v95, 4
    %v97 = vadd.f32 %v95, %v96
    %v98 = vrot.slane %v97, 2
    %v99 = vadd.f32 %v97, %v98
    %v100 = vrot.slane %v99, 1
    %v101 = vadd.f32 %v99, %v100
    %s102 = vtos %v101
    %p103 = scmp.eq.s32.totalorder 0, 0
    // Predicated region
    $region18: #{tpu_custom_call.1} parent=1 // pred_check
      %p104 = pneg %p103
    $region19: #{tpu_custom_call.1} parent=1 // pred_check_branch
      %106 = sbr.rel (%p104) target = $region21
    $region20: #{tpu_custom_call.1} parent=1 // pred_region
      %s107 = scalar_lea.smem [#allocation2], 0
      %108 = sst [smem:[%s107]] 0.0
    $region21: #{tpu_custom_call.1} parent=1 // pred_fallthru
      _
    %s109 = sld [smem:[#allocation2]]
    %s110 = sadd.f32 %s109, %s102
    %s111 = scalar_lea.smem [#allocation2], 0
    %112 = sst [smem:[%s111]] %s110
    // Predicated region
    $region22: #{tpu_custom_call.1} parent=1 // pred_check
      %p113 = pneg %p103
    $region23: #{tpu_custom_call.1} parent=1 // pred_check_branch
      %115 = sbr.rel (%p113) target = $region25
    $region24: #{tpu_custom_call.1} parent=1 // pred_region
      %s116 = sld [smem:[#allocation2]]
      %v117 = vrcp.pop 4.0
      %s118 = vtos %v117
      %s119 = smul.f32 %s116, %s118
      %s120 = scalar_lea.smem [#allocation8], 0
      %121 = sst [smem:[%s120]] %s119
    $region25: #{tpu_custom_call.1} parent=1 // pred_fallthru
      _
    // Predicated region
    $region26: #{tpu_custom_call.1} parent=1 // pred_check
      _
    $region27: #{tpu_custom_call.1} parent=1 // pred_check_branch
      %123 = sbr.rel (0) target = $region29
    $region28: #{tpu_custom_call.1} parent=1 // pred_region
      %s125 = ssub.s32 16, 16
      %126 = vsyncadd [#allocation5], %s125
      %129 = dma.smem_to_hbm [#allocation8], 16, %s2, [#allocation5]
    $region29: #{tpu_custom_call.1} parent=1 // pred_fallthru
      _
    // Predicated region
    $region30: #{tpu_custom_call.1} parent=1 // pred_check
      _
    $region31: #{tpu_custom_call.1} parent=1 // pred_check_branch
      %131 = sbr.rel (0) target = $region33
    $region32: #{tpu_custom_call.1} parent=1 // pred_region
      %132 = dma.done [#allocation5], 16
    $region33: #{tpu_custom_call.1} parent=1 // pred_fallthru
      _
    %133 = sfence
    %134 = vsyncpa [#allocation4], 1
    %135 = vsyncpa [#allocation7], 1
    %136 = vsyncpa [#allocation5], 1

</llo_original>
